<compile_context>
chip_gen: v7x
topology: tpu7x:2x2x1
jax: 0.10.0
libtpu: 0.0.40
codegen_flags: <defaults>
</compile_context>

<pallas_src>
import jax
import jax.numpy as jnp
from jax.experimental import pallas as pl
from jax.experimental.pallas import tpu as pltpu

NUM_TRAIN_TIMESTEPS = 1000
WAN_DIM = 32          # surrogate wan.dim -> Classifier(input_dim=wan_dim)
SEQ_LEN = 8           # classify-mode token count
LANE = 128            # TPU lane width
SUB = 8               # TPU sublane count
MAX_TILE_ROWS = 1024  # 128-lane rows per block (<= 512 KiB per f32 stream buffer)

_SMEM = pltpu.MemorySpace.SMEM
_VMEM = pltpu.MemorySpace.VMEM
_F32_MAX = float(jnp.finfo(jnp.float32).max)

_COMPILER_PARAMS = pltpu.CompilerParams(
    dimension_semantics=("parallel", "arbitrary"),   # batch | row-tile (reduction)
    vmem_limit_bytes=32 * 1024 * 1024)               # safe on v5e / v6e / v7x


def _row_tile(S):
    """Largest multiple-of-8 divisor of S that is <= MAX_TILE_ROWS."""
    best = SUB
    ts = SUB
    while ts <= min(S, MAX_TILE_ROWS):
        if S % ts == 0:
            best = ts
        ts += SUB
    return best


def _accumulate(ref, part, t):
    """Init-or-add a (1, 1, 128) partial into a per-sample accumulator block."""
    @pl.when(t == 0)
    def _():
        ref[...] = part

    @pl.when(t > 0)
    def _():
        ref[...] += part


# ----------------------------------------------------------------------------
# Kernel bodies.
# ----------------------------------------------------------------------------
def _make_gen_stats_kernel(emit_x0):
    """Pass 1: per-sample sum|lat - noise + v_real| (+ optional fake/real x0)."""
    if emit_x0:
        def kernel(sigma_ref, lat_ref, noise_ref, vreal_ref, vfake_ref,
                   fake_x0_ref, real_x0_ref, absum_ref):
            t = pl.program_id(1)
            lat = lat_ref[...].astype(jnp.float32)
            noi = noise_ref[...].astype(jnp.float32)
            vre = vreal_ref[...].astype(jnp.float32)
            base = lat - noi + vre                        # p_real / sigma
            _accumulate(absum_ref,
                        jnp.sum(jnp.abs(base), axis=1, keepdims=True), t)
            sigma = sigma_ref[0, 0]
            noisy = (1.0 - sigma) * lat + sigma * noi     # scheduler.add_noise
            real_x0_ref[...] = (noisy - sigma * vre).astype(real_x0_ref.dtype)
            vfk = vfake_ref[...].astype(jnp.float32)
            fake_x0_ref[...] = (noisy - sigma * vfk).astype(fake_x0_ref.dtype)
    else:
        def kernel(lat_ref, noise_ref, vreal_ref, absum_ref):
            t = pl.program_id(1)
            base = (lat_ref[...].astype(jnp.float32)
                    - noise_ref[...].astype(jnp.float32)
                    + vreal_ref[...].astype(jnp.float32))
            _accumulate(absum_ref,
                        jnp.sum(jnp.abs(base), axis=1, keepdims=True), t)
    return kernel


def _make_gen_grad_kernel(emit_grad):
    """Pass 2: grad = (v_real - v_fake) * inv_mean[b] (nan_to_num) + sum(g^2)."""
    def _grad_tile(inv_ref, vfake_ref, vreal_ref):
        b = pl.program_id(0)
        g = (vreal_ref[...].astype(jnp.float32)
             - vfake_ref[...].astype(jnp.float32)) * inv_ref[b, 0]
        g = jnp.where(jnp.isnan(g), 0.0, g)         # torch.nan_to_num: nan -> 0
        return jnp.clip(g, -_F32_MAX, _F32_MAX)     # +/-inf -> finite extremes

    if emit_grad:
        def kernel(inv_ref, vfake_ref, vreal_ref, grad_ref, ssq_ref):
            t = pl.program_id(1)
            g = _grad_tile(inv_ref, vfake_ref, vreal_ref)
            grad_ref[...] = g.astype(grad_ref.dtype)
            _accumulate(ssq_ref, jnp.sum(g * g, axis=1, keepdims=True), t)
    else:
        def kernel(inv_ref, vfake_ref, vreal_ref, ssq_ref):
            t = pl.program_id(1)
            g = _grad_tile(inv_ref, vfake_ref, vreal_ref)
            _accumulate(ssq_ref, jnp.sum(g * g, axis=1, keepdims=True), t)
    return kernel


def _make_guidance_kernel(emit_logs):
    """add_noise + first-order x0 + per-sample sum((lat - x0)^2) partials."""
    def _core(sigma_ref, lat_ref, noise_ref, vfake_ref):
        sigma = sigma_ref[0, 0]
        lat = lat_ref[...].astype(jnp.float32)
        noi = noise_ref[...].astype(jnp.float32)
        vfk = vfake_ref[...].astype(jnp.float32)
        noisy = (1.0 - sigma) * lat + sigma * noi
        x0 = noisy - sigma * vfk
        d = lat - x0
        return noisy, x0, jnp.sum(d * d, axis=1, keepdims=True)

    if emit_logs:
        def kernel(sigma_ref, lat_ref, noise_ref, vfake_ref,
                   noisy_ref, x0_ref, dsq_ref):
            t = pl.program_id(1)
            noisy, x0, part = _core(sigma_ref, lat_ref, noise_ref, vfake_ref)
            noisy_ref[...] = noisy.astype(noisy_ref.dtype)
            x0_ref[...] = x0.astype(x0_ref.dtype)
            _accumulate(dsq_ref, part, t)
    else:
        def kernel(sigma_ref, lat_ref, noise_ref, vfake_ref, dsq_ref):
            t = pl.program_id(1)
            _, _, part = _core(sigma_ref, lat_ref, noise_ref, vfake_ref)
            _accumulate(dsq_ref, part, t)
    return kernel


def _classifier_kernel(b_ref, rep_ref, w_ref, logits_ref):
    # TODO(synk): exact Classifier architecture is not given; modeled as a
    # token mean-pool followed by a single Linear(D, 1) on the VPU.
    pooled = jnp.mean(rep_ref[...].astype(jnp.float32), axis=1, keepdims=True)
    w = w_ref[...].astype(jnp.float32)
    logits_ref[...] = jnp.sum(pooled * w, axis=2, keepdims=True) + b_ref[0, 0]


# ----------------------------------------------------------------------------
# Wrappers.
# ----------------------------------------------------------------------------
def _geometry(latents):
    B, C, H, W = latents.shape
    N = C * H * W
    assert N % (SUB * LANE) == 0, "C*H*W must be a multiple of 1024"
    S = N // LANE
    TS = _row_tile(S)
    return B, C, H, W, N, S, TS, S // TS


def _specs(TS):
    big = pl.BlockSpec((1, TS, LANE), lambda b, t: (b, t, 0))
    acc = pl.BlockSpec((1, 1, LANE), lambda b, t: (b, 0, 0))
    smem = pl.BlockSpec(memory_space=_SMEM)
    return big, acc, smem


def classifier_logits(rep, w_cls, b_cls):
    """cls_pred_branch surrogate: mean-pool + Linear(D, 1); returns [B]."""
    B, _, D = rep.shape
    vmem = pl.BlockSpec(memory_space=_VMEM)
    smem = pl.BlockSpec(memory_space=_SMEM)
    logits = pl.pallas_call(
        _classifier_kernel,
        out_shape=jax.ShapeDtypeStruct((B, 1, 1), jnp.float32),
        in_specs=[smem, vmem, vmem],
        out_specs=vmem,
    )(b_cls, rep, w_cls.reshape(1, 1, D))
    return logits[:, 0, 0]


def generator_losses(latents, noise, pred_v_fake, pred_v_real, sigma,
                     rep, w_cls, b_cls, *, emit_logs=True):
    """generator_forward: distribution-matching loss + generator cls loss."""
    B, C, H, W, N, S, TS, T = _geometry(latents)
    shp3 = (B, S, LANE)
    big, acc, smem = _specs(TS)
    esz = jnp.dtype(latents.dtype).itemsize
    lat3 = latents.reshape(shp3)
    noi3 = noise.reshape(shp3)
    vfk3 = pred_v_fake.reshape(shp3)
    vre3 = pred_v_real.reshape(shp3)
    acc_shape = jax.ShapeDtypeStruct((B, 1, LANE), jnp.float32)

    # ---- pass 1: per-sample sum|lat - noise + v_real| (+ optional x0 logs) --
    if emit_logs:
        fake_x0_3, real_x0_3, absum_lanes = pl.pallas_call(
            _make_gen_stats_kernel(True),
            out_shape=(jax.ShapeDtypeStruct(shp3, latents.dtype),
                       jax.ShapeDtypeStruct(shp3, latents.dtype),
                       acc_shape),
            grid=(B, T),
            in_specs=[smem, big, big, big, big],
            out_specs=(big, big, acc),
            compiler_params=_COMPILER_PARAMS,
            cost_estimate=pl.CostEstimate(flops=int(11 * B * N),
                                          transcendentals=0,
                                          bytes_accessed=int(6 * B * N * esz)),
        )(sigma, lat3, noi3, vre3, vfk3)
    else:
        (absum_lanes,) = pl.pallas_call(
            _make_gen_stats_kernel(False),
            out_shape=(acc_shape,),
            grid=(B, T),
            in_specs=[big, big, big],
            out_specs=(acc,),
            compiler_params=_COMPILER_PARAMS,
            cost_estimate=pl.CostEstimate(flops=int(4 * B * N),
                                          transcendentals=0,
                                          bytes_accessed=int(3 * B * N * esz)),
        )(lat3, noi3, vre3)

    # per-sample mean|p_real| = sigma * sum|lat - noise + v_real| / N (sigma>0)
    # => grad = (v_real - v_fake) * N / sum|...| ; sigma cancels exactly.
    # TODO(synk): assumes sigma > 0 (always true for sampled scheduler steps).
    abs_sum = jnp.sum(absum_lanes, axis=(1, 2))              # [B], exact finish
    inv_mean = (jnp.float32(N) / abs_sum).reshape(B, 1)      # 0-sum -> +inf path

    # ---- pass 2: grad tiles + per-sample sum(grad^2) partials ---------------
    if emit_logs:
        grad3, ssq_lanes = pl.pallas_call(
            _make_gen_grad_kernel(True),
            out_shape=(jax.ShapeDtypeStruct(shp3, latents.dtype), acc_shape),
            grid=(B, T),
            in_specs=[smem, big, big],
            out_specs=(big, acc),
            compiler_params=_COMPILER_PARAMS,
            cost_estimate=pl.CostEstimate(flops=int(7 * B * N),
                                          transcendentals=0,
                                          bytes_accessed=int(3 * B * N * esz)),
        )(inv_mean, vfk3, vre3)
    else:
        grad3 = None
        (ssq_lanes,) = pl.pallas_call(
            _make_gen_grad_kernel(False),
            out_shape=(acc_shape,),
            grid=(B, T),
            in_specs=[smem, big, big],
            out_specs=(acc,),
            compiler_params=_COMPILER_PARAMS,
            cost_estimate=pl.CostEstimate(flops=int(7 * B * N),
                                          transcendentals=0,
                                          bytes_accessed=int(2 * B * N * esz)),
        )(inv_mean, vfk3, vre3)

    sumsq = jnp.sum(ssq_lanes)                       # whole-batch sum(grad^2)
    loss_dm = 0.5 * sumsq / jnp.float32(B * N)       # 0.5 * mse(lat, lat - grad)
    grad_norm = jnp.sqrt(sumsq)                      # torch.norm(grad)

    logits = classifier_logits(rep, w_cls, b_cls)    # cls_pred_branch
    gen_cls_loss = jnp.mean(jax.nn.softplus(-logits))

    loss_dict = {"loss_dm": loss_dm, "gen_cls_loss": gen_cls_loss}
    log_dict = {"dmtrain_gradient_norm": grad_norm}
    if emit_logs:
        log_dict["dmtrain_grad"] = grad3.reshape(B, C, H, W).astype(jnp.float32)
        log_dict["dmtrain_pred_real_video"] = (
            real_x0_3.reshape(B, C, H, W).astype(jnp.float32))
        log_dict["dmtrain_pred_fake_video"] = (
            fake_x0_3.reshape(B, C, H, W).astype(jnp.float32))
    return loss_dict, log_dict


def guidance_losses(latents, noise, pred_v_fake, sigma, rep_fake, rep_real,
                    w_cls, b_cls, *, emit_logs=True):
    """guidance_forward: critic (loss_fake) + guidance classifier loss."""
    B, C, H, W, N, S, TS, T = _geometry(latents)
    shp3 = (B, S, LANE)
    big, acc, smem = _specs(TS)
    esz = jnp.dtype(latents.dtype).itemsize
    lat3 = latents.reshape(shp3)
    noi3 = noise.reshape(shp3)
    vfk3 = pred_v_fake.reshape(shp3)
    acc_shape = jax.ShapeDtypeStruct((B, 1, LANE), jnp.float32)

    if emit_logs:
        noisy3, x03, dsq_lanes = pl.pallas_call(
            _make_guidance_kernel(True),
            out_shape=(jax.ShapeDtypeStruct(shp3, latents.dtype),
                       jax.ShapeDtypeStruct(shp3, latents.dtype),
                       acc_shape),
            grid=(B, T),
            in_specs=[smem, big, big, big],
            out_specs=(big, big, acc),
            compiler_params=_COMPILER_PARAMS,
            cost_estimate=pl.CostEstimate(flops=int(9 * B * N),
                                          transcendentals=0,
                                          bytes_accessed=int(5 * B * N * esz)),
        )(sigma, lat3, noi3, vfk3)
    else:
        (dsq_lanes,) = pl.pallas_call(
            _make_guidance_kernel(False),
            out_shape=(acc_shape,),
            grid=(B, T),
            in_specs=[smem, big, big, big],
            out_specs=(acc,),
            compiler_params=_COMPILER_PARAMS,
            cost_estimate=pl.CostEstimate(flops=int(9 * B * N),
                                          transcendentals=0,
                                          bytes_accessed=int(3 * B * N * esz)),
        )(sigma, lat3, noi3, vfk3)

    loss_fake = jnp.sum(dsq_lanes) / jnp.float32(B * N)   # mean((lat - x0)^2)

    logit_fake = classifier_logits(rep_fake, w_cls, b_cls)
    logit_real = classifier_logits(rep_real, w_cls, b_cls)
    guidance_cls_loss = (jnp.mean(jax.nn.softplus(logit_fake)) +
                         jnp.mean(jax.nn.softplus(-logit_real)))

    loss_dict = {"loss_fake_mean": loss_fake,
                 "guidance_cls_loss": guidance_cls_loss}
    log_dict = {"faketrain_latents": latents.astype(jnp.float32),
                "pred_realism_on_real": jax.nn.sigmoid(logit_real),
                "pred_realism_on_fake": jax.nn.sigmoid(logit_fake)}
    if emit_logs:
        log_dict["faketrain_noisy_latents"] = (
            noisy3.reshape(B, C, H, W).astype(jnp.float32))
        log_dict["faketrain_x0_pred"] = (
            x03.reshape(B, C, H, W).astype(jnp.float32))
    return loss_dict, log_dict


if __name__ == "__main__":
    key = jax.random.PRNGKey(0)
    B, C, H, W = 2, 4, 16, 16
    ks = jax.random.split(key, 6)

    latents = jax.random.normal(ks[0], (B, C, H, W), jnp.float32)
    noise = jax.random.normal(ks[1], (B, C, H, W), jnp.float32)
    # TODO(synk): stand-ins for the WanModel (LoRA-on / LoRA-off) velocity
    # predictions and the classify-mode representations (pretrained DiT).
    pred_v_fake = jax.random.normal(ks[2], (B, C, H, W), jnp.float32)
    pred_v_real = jax.random.normal(ks[3], (B, C, H, W), jnp.float32)
    rep_fake = jax.random.normal(ks[4], (B, SEQ_LEN, WAN_DIM), jnp.float32)
    rep_real = jax.random.normal(ks[5], (B, SEQ_LEN, WAN_DIM), jnp.float32)

    # Deterministic classifier-head parameters (lane-dense (1, D) weight).
    w_cls = ((jnp.arange(WAN_DIM, dtype=jnp.float32) - WAN_DIM / 2.0)
             * 0.01).reshape(1, WAN_DIM)
    b_cls = jnp.zeros((1, 1), jnp.float32)

    # Deterministic sampled step index -> flow-matching sigma in (0, 1).
    index = 7
    timestep = NUM_TRAIN_TIMESTEPS - index * 20      # scheduler.timesteps[index]
    sigma = jnp.full((1, 1), timestep / NUM_TRAIN_TIMESTEPS, jnp.float32)

    gen_loss, gen_log = generator_losses(
        latents, noise, pred_v_fake, pred_v_real, sigma, rep_fake, w_cls, b_cls,
        emit_logs=True)
    gui_loss, gui_log = guidance_losses(
        latents, noise, pred_v_fake, sigma, rep_fake, rep_real, w_cls, b_cls,
        emit_logs=True)
    # Non-logging training-step variants (skip log-only HBM writes entirely).
    gen_loss_fast, _ = generator_losses(
        latents, noise, pred_v_fake, pred_v_real, sigma, rep_fake, w_cls, b_cls,
        emit_logs=False)
    gui_loss_fast, _ = guidance_losses(
        latents, noise, pred_v_fake, sigma, rep_fake, rep_real, w_cls, b_cls,
        emit_logs=False)

    for d in (gen_loss, gen_log, gui_loss, gui_log, gen_loss_fast, gui_loss_fast):
        for v in d.values():
            jax.block_until_ready(v)

    print("KERNEL_OK")
</pallas_src>

<mosaic_0001>
module attributes {stable_mosaic.version = 11 : i64} {
  func.func @kernel(%arg0: i32, %arg1: i32, %arg2: memref<1x1xf32, #tpu.memory_space<smem>>, %arg3: memref<1x8x128xf32, #tpu.memory_space<vmem>>, %arg4: memref<1x8x128xf32, #tpu.memory_space<vmem>>, %arg5: memref<1x8x128xf32, #tpu.memory_space<vmem>>, %arg6: memref<1x8x128xf32, #tpu.memory_space<vmem>>, %arg7: memref<1x8x128xf32, #tpu.memory_space<vmem>>, %arg8: memref<1x8x128xf32, #tpu.memory_space<vmem>>, %arg9: memref<1x1x128xf32, #tpu.memory_space<vmem>>) attributes {dimension_semantics = [#tpu.dimension_semantics<parallel>, #tpu.dimension_semantics<arbitrary>], iteration_bounds = array<i64: 2, 1>, scalar_prefetch = 0 : i64, scratch_operands = 0 : i64, tpu.core_type = #tpu.core_type<tc>, window_params = [{transform_indices = @transform_0, window_bounds = array<i64: 1, 1>}, {transform_indices = @transform_1, window_bounds = array<i64: 1, 8, 128>}, {transform_indices = @transform_2, window_bounds = array<i64: 1, 8, 128>}, {transform_indices = @transform_3, window_bounds = array<i64: 1, 8, 128>}, {transform_indices = @transform_4, window_bounds = array<i64: 1, 8, 128>}, {transform_indices = @transform_5, window_bounds = array<i64: 1, 8, 128>}, {transform_indices = @transform_6, window_bounds = array<i64: 1, 8, 128>}, {transform_indices = @transform_7, window_bounds = array<i64: 1, 1, 128>}]} {
    %c0 = arith.constant 0 : index
    %c0_0 = arith.constant 0 : index
    %c0_1 = arith.constant 0 : index
    %0 = vector.load %arg3[%c0, %c0_0, %c0_1] : memref<1x8x128xf32, #tpu.memory_space<vmem>>, vector<1x8x128xf32>
    %c0_2 = arith.constant 0 : index
    %c0_3 = arith.constant 0 : index
    %c0_4 = arith.constant 0 : index
    %1 = vector.load %arg4[%c0_2, %c0_3, %c0_4] : memref<1x8x128xf32, #tpu.memory_space<vmem>>, vector<1x8x128xf32>
    %c0_5 = arith.constant 0 : index
    %c0_6 = arith.constant 0 : index
    %c0_7 = arith.constant 0 : index
    %2 = vector.load %arg5[%c0_5, %c0_6, %c0_7] : memref<1x8x128xf32, #tpu.memory_space<vmem>>, vector<1x8x128xf32>
    %3 = arith.subf %0, %1 : vector<1x8x128xf32>
    %4 = arith.addf %3, %2 : vector<1x8x128xf32>
    %5 = math.absf %4 : vector<1x8x128xf32>
    %cst = arith.constant dense<0.000000e+00> : vector<1x128xf32>
    %6 = vector.multi_reduction <add>, %5, %cst [1] : vector<1x8x128xf32> to vector<1x128xf32>
    %7 = vector.shape_cast %6 : vector<1x128xf32> to vector<1x1x128xf32>
    %c0_i32 = arith.constant 0 : i32
    %8 = arith.cmpi eq, %arg1, %c0_i32 : i32
    %9 = arith.extui %8 : i1 to i32
    %c0_i32_8 = arith.constant 0 : i32
    %10 = arith.cmpi ne, %9, %c0_i32_8 : i32
    scf.if %10 {
      %c0_23 = arith.constant 0 : index
      %c0_24 = arith.constant 0 : index
      %c0_25 = arith.constant 0 : index
      %30 = vector.load %arg9[%c0_23, %c0_24, %c0_25] : memref<1x1x128xf32, #tpu.memory_space<vmem>>, vector<1x1x128xf32>
      tpu.vector_store %arg9[%c0_23, %c0_24, %c0_25], %7 {strides = array<i32>} : memref<1x1x128xf32, #tpu.memory_space<vmem>>, vector<1x1x128xf32>,
    } else {
    }
    %c0_i32_9 = arith.constant 0 : i32
    %11 = arith.cmpi sgt, %arg1, %c0_i32_9 : i32
    %12 = arith.extui %11 : i1 to i32
    %c0_i32_10 = arith.constant 0 : i32
    %13 = arith.cmpi ne, %12, %c0_i32_10 : i32
    scf.if %13 {
      %c0_23 = arith.constant 0 : index
      %c0_24 = arith.constant 0 : index
      %c0_25 = arith.constant 0 : index
      %30 = vector.load %arg9[%c0_23, %c0_24, %c0_25] : memref<1x1x128xf32, #tpu.memory_space<vmem>>, vector<1x1x128xf32>
      %31 = arith.addf %30, %7 : vector<1x1x128xf32>
      %c0_26 = arith.constant 0 : index
      %c0_27 = arith.constant 0 : index
      %c0_28 = arith.constant 0 : index
      %32 = vector.load %arg9[%c0_26, %c0_27, %c0_28] : memref<1x1x128xf32, #tpu.memory_space<vmem>>, vector<1x1x128xf32>
      tpu.vector_store %arg9[%c0_26, %c0_27, %c0_28], %31 {strides = array<i32>} : memref<1x1x128xf32, #tpu.memory_space<vmem>>, vector<1x1x128xf32>,
    } else {
    }
    %c0_11 = arith.constant 0 : index
    %c0_12 = arith.constant 0 : index
    %14 = memref.load %arg2[%c0_11, %c0_12] : memref<1x1xf32, #tpu.memory_space<smem>>
    %cst_13 = arith.constant 1.000000e+00 : f32
    %15 = arith.subf %cst_13, %14 : f32
    %16 = vector.broadcast %15 : f32 to vector<1x8x128xf32>
    %17 = arith.mulf %16, %0 : vector<1x8x128xf32>
    %18 = vector.broadcast %14 : f32 to vector<1x8x128xf32>
    %19 = arith.mulf %18, %1 : vector<1x8x128xf32>
    %20 = arith.addf %17, %19 : vector<1x8x128xf32>
    %21 = vector.broadcast %14 : f32 to vector<1x8x128xf32>
    %22 = arith.mulf %21, %2 : vector<1x8x128xf32>
    %23 = arith.subf %20, %22 : vector<1x8x128xf32>
    %c0_14 = arith.constant 0 : index
    %c0_15 = arith.constant 0 : index
    %c0_16 = arith.constant 0 : index
    %24 = vector.load %arg8[%c0_14, %c0_15, %c0_16] : memref<1x8x128xf32, #tpu.memory_space<vmem>>, vector<1x8x128xf32>
    tpu.vector_store %arg8[%c0_14, %c0_15, %c0_16], %23 {strides = array<i32>} : memref<1x8x128xf32, #tpu.memory_space<vmem>>, vector<1x8x128xf32>,
    %c0_17 = arith.constant 0 : index
    %c0_18 = arith.constant 0 : index
    %c0_19 = arith.constant 0 : index
    %25 = vector.load %arg6[%c0_17, %c0_18, %c0_19] : memref<1x8x128xf32, #tpu.memory_space<vmem>>, vector<1x8x128xf32>
    %26 = vector.broadcast %14 : f32 to vector<1x8x128xf32>
    %27 = arith.mulf %26, %25 : vector<1x8x128xf32>
    %28 = arith.subf %20, %27 : vector<1x8x128xf32>
    %c0_20 = arith.constant 0 : index
    %c0_21 = arith.constant 0 : index
    %c0_22 = arith.constant 0 : index
    %29 = vector.load %arg7[%c0_20, %c0_21, %c0_22] : memref<1x8x128xf32, #tpu.memory_space<vmem>>, vector<1x8x128xf32>
    tpu.vector_store %arg7[%c0_20, %c0_21, %c0_22], %28 {strides = array<i32>} : memref<1x8x128xf32, #tpu.memory_space<vmem>>, vector<1x8x128xf32>,
    return
  }
  func.func @transform_0(%arg0: i32, %arg1: i32) -> (i32, i32) {
    %c0_i32 = arith.constant 0 : i32
    %c0_i32_0 = arith.constant 0 : i32
    %c0_i32_1 = arith.constant 0 : i32
    return %c0_i32, %c0_i32_0 : i32, i32
  }
  func.func @transform_1(%arg0: i32, %arg1: i32) -> (i32, i32, i32) {
    %c0_i32 = arith.constant 0 : i32
    %c0_i32_0 = arith.constant 0 : i32
    return %arg0, %arg1, %c0_i32 : i32, i32, i32
  }
  func.func @transform_2(%arg0: i32, %arg1: i32) -> (i32, i32, i32) {
    %c0_i32 = arith.constant 0 : i32
    %c0_i32_0 = arith.constant 0 : i32
    return %arg0, %arg1, %c0_i32 : i32, i32, i32
  }
  func.func @transform_3(%arg0: i32, %arg1: i32) -> (i32, i32, i32) {
    %c0_i32 = arith.constant 0 : i32
    %c0_i32_0 = arith.constant 0 : i32
    return %arg0, %arg1, %c0_i32 : i32, i32, i32
  }
  func.func @transform_4(%arg0: i32, %arg1: i32) -> (i32, i32, i32) {
    %c0_i32 = arith.constant 0 : i32
    %c0_i32_0 = arith.constant 0 : i32
    return %arg0, %arg1, %c0_i32 : i32, i32, i32
  }
  func.func @transform_5(%arg0: i32, %arg1: i32) -> (i32, i32, i32) {
    %c0_i32 = arith.constant 0 : i32
    %c0_i32_0 = arith.constant 0 : i32
    return %arg0, %arg1, %c0_i32 : i32, i32, i32
  }
  func.func @transform_6(%arg0: i32, %arg1: i32) -> (i32, i32, i32) {
    %c0_i32 = arith.constant 0 : i32
    %c0_i32_0 = arith.constant 0 : i32
    return %arg0, %arg1, %c0_i32 : i32, i32, i32
  }
  func.func @transform_7(%arg0: i32, %arg1: i32) -> (i32, i32, i32) {
    %c0_i32 = arith.constant 0 : i32
    %c0_i32_0 = arith.constant 0 : i32
    %c0_i32_1 = arith.constant 0 : i32
    return %arg0, %c0_i32, %c0_i32_0 : i32, i32, i32
  }
}

</mosaic_0001>

<llo_original>
// kernel: tpu_custom_call.1
$region0: #{tpu_custom_call.1}
  #allocation0 [shape = 'u32[]', space=smem, size = 0x4, offset = 0x4, fixed_abs, tag = 'smem constant byte address 0x4 - core index']
  #allocation1 [shape = 'u32[144,128]{1,0:T(1,128)}', space=vmem, size = 0x12000, scoped, tag = 'internal scratch']
  #allocation2 [shape = 'f32[1,1]{1,0:T(1,128)S(6)}', space=smem, size = 0x200, scoped, tag = 'scoped memory for tpu_custom_call.1']
  %s0 = inlined_call_operand.<no memory space> [shape: f32[1,1], index: 0, kind: input, shape index: {}]
  %s1 = inlined_call_operand.hbm [shape: f32[2,8,128], index: 1, kind: input, shape index: {}]
  %s2 = inlined_call_operand.hbm [shape: f32[2,8,128], index: 2, kind: input, shape index: {}]
  %s3 = inlined_call_operand.hbm [shape: f32[2,8,128], index: 3, kind: input, shape index: {}]
  %s4 = inlined_call_operand.hbm [shape: f32[2,8,128], index: 4, kind: input, shape index: {}]
  %s5 = inlined_call_operand.hbm [shape: f32[2,8,128], index: 5, kind: output, shape index: {0}]
  %s6 = inlined_call_operand.hbm [shape: f32[2,8,128], index: 6, kind: output, shape index: {1}]
  %s7 = inlined_call_operand.hbm [shape: f32[2,1,128], index: 7, kind: output, shape index: {2}]
  %8 = xla_tuple %s5, %s6, %s7
  %s9 = sld [smem:[#allocation0]]
  $region93: #{tpu_custom_call.1} parent=0
    _
  %s11 = ssub.s32 1, %s9
  %s12 = scalar_select 0, %s11, %s9
  %13 = sst [smem:[#allocation2]] %s0
  $region1: #{tpu_custom_call.1} parent=0
    #allocation3 [shape = 'u8[8192]{0}', space=vmem, size = 0x2000, scoped, tag = 'input window, operand 1']
    #allocation4 [shape = 's32[2]{0}', space=sflag, size = 0x8, scoped, tag = 'scoped memory for tpu_custom_call.1']
    #allocation5 [shape = 's32[2]{0}', space=sflag, size = 0x8, scoped, tag = 'scoped memory for tpu_custom_call.1']
    #allocation6 [shape = 'u8[8192]{0}', space=vmem, size = 0x2000, scoped, tag = 'input window, operand 2']
    #allocation7 [shape = 's32[2]{0}', space=sflag, size = 0x8, scoped, tag = 'scoped memory for tpu_custom_call.1']
    #allocation8 [shape = 'u8[8192]{0}', space=vmem, size = 0x2000, scoped, tag = 'input window, operand 3']
    #allocation9 [shape = 'u8[8192]{0}', space=vmem, size = 0x2000, scoped, tag = 'input window, operand 4']
    #allocation10 [shape = 's32[2]{0}', space=sflag, size = 0x8, scoped, tag = 'scoped memory for tpu_custom_call.1']
    #allocation11 [shape = 'u8[8192]{0}', space=vmem, size = 0x2000, scoped, tag = 'output window, operand 0']
    #allocation12 [shape = 'u8[8192]{0}', space=vmem, size = 0x2000, scoped, tag = 'output window, operand 1']
    #allocation13 [shape = 's32[2]{0}', space=sflag, size = 0x8, scoped, tag = 'scoped memory for tpu_custom_call.1']
    #allocation14 [shape = 'u8[1024]{0}', space=vmem, size = 0x400, scoped, tag = 'output window, operand 2']
    %14 = vsyncpa [#allocation4], 0
    %s15 = scalar_lea.sflag [#allocation4], 1
    %16 = vsyncpa %s15, 0
    %17 = vsyncpa [#allocation7], 0
    %s18 = scalar_lea.sflag [#allocation7], 1
    %19 = vsyncpa %s18, 0
    %20 = vsyncpa [#allocation10], 0
    %s21 = scalar_lea.sflag [#allocation10], 1
    %22 = vsyncpa %s21, 0
    %23 = vsyncpa [#allocation5], 0
    %s24 = scalar_lea.sflag [#allocation5], 1
    %25 = vsyncpa %s24, 0
    %26 = vsyncpa [#allocation13], 0
    %s27 = scalar_lea.sflag [#allocation13], 1
    %28 = vsyncpa %s27, 0
    loop: start=0, step=1, limit=4
    $region2: #{tpu_custom_call.1} parent=1 // loop_pre_header
      _
    $region3: #{tpu_custom_call.1} parent=1 // loop_header
      %s30 = sphi 0, %s34
      %p31 = scmp.ge.s32.totalorder %s30, 4
      %s37 = sphi 0, %s49
      %s38 = sphi 0, %s45
      %s39 = sphi 0, %s37
      %s40 = sphi 0, %s38
      %s41 = sphi 0, %s39
      %s42 = sphi 0, %s40
      %s50 = sphi 0, %s50
      %s52 = sphi 0, %s50
      %s53 = sphi 0, %s52
      %s67 = sphi 0, %s53
      %s75 = sphi 0, %s77
      %s78 = sphi 0, %s75
      %s79 = sphi 0, %s78
      %s95 = sphi 0, %s79
      %s103 = sphi 0, %s105
      %s106 = sphi 0, %s103
      %s107 = sphi 0, %s106
      %s123 = sphi 0, %s107
      %s131 = sphi 0, %s133
      %s134 = sphi 0, %s131
      %s135 = sphi 0, %s134
      %s151 = sphi 0, %s135
      %s159 = sphi 0, %s161
      %s162 = sphi 0, %s159
      %s163 = sphi 0, %s162
      %s179 = sphi 0, %s163
      %s187 = sphi 0, %s189
      %s190 = sphi 0, %s187
      %s191 = sphi 0, %s190
      %s207 = sphi 0, %s191
      %s215 = sphi 0, %s217
      %s218 = sphi 0, %s215
      %s219 = sphi 0, %s218
      %s235 = sphi 0, %s219
      %s241 = sphi 0, %s243
      %s244 = sphi 0, %s241
      %s245 = sphi 0, %s244
      %s261 = sphi 0, %s245
    $region4: #{tpu_custom_call.1} parent=1 // loop_header_branch
      %33 = sbr.rel (%p31) target = $region8
    $region5: #{tpu_custom_call.1} parent=1 // loop_body
      %s35 = ssub.s32 %s30, 1
      %s36 = ssub.s32 %s30, 2
      %s43 = sadd.s32 1, %s38
      %p44 = scmp.ge.s32.totalorder %s43, 1
      %s45 = scalar_select %p44, 0, %s43
      %s46 = sadd.s32 1, %s37
      %s47 = scalar_select %p44, %s46, %s37
      %p48 = scmp.ge.s32.totalorder %s47, 2
      %s49 = scalar_select %p48, 0, %s47
      %s51 = sadd.s32 %s50, 1
      %p54 = scmp.eq.s32.totalorder %s30, 1
      %p55 = scmp.ne.s32.totalorder %s50, %s52
      %p56 = scmp.eq.s32.totalorder %s30, 0
      %p57 = por %p55, %p56
      %p58 = scmp.ne.s32.totalorder %s50, %s52
      %p59 = scmp.eq.s32.totalorder %s35, 1
      %p60 = por %p58, %p59
      %p61 = scmp.ne.s32.totalorder %s52, %s53
      %p62 = scmp.eq.s32.totalorder %s35, 0
      %p63 = por %p61, %p62
      %p64 = scmp.ne.s32.totalorder %s52, %s53
      %p65 = scmp.eq.s32.totalorder %s36, 1
      %p66 = por %p64, %p65
      %p68 = scmp.ne.s32.totalorder %s53, %s67
      %p69 = scmp.eq.s32.totalorder %s36, 0
      %p70 = por %p68, %p69
      %s71 = ssub.s32 %s37, %s49
      %s72 = ssub.s32 %s38, %s45
      %s73 = sor.u32 %s71, %s72
      %p74 = scmp.eq.s32.totalorder %s73, 0
      %s76 = sadd.s32 %s75, 1
      %s77 = scalar_select %p74, %s75, %s76
      %p80 = pneg %p74
      %p81 = scmp.eq.s32.totalorder %s30, 1
      %p82 = por %p80, %p81
      %p83 = scmp.ne.s32.totalorder %s75, %s78
      %p84 = scmp.eq.s32.totalorder %s30, 0
      %p85 = por %p83, %p84
      %p86 = scmp.ne.s32.totalorder %s75, %s78
      %p87 = scmp.eq.s32.totalorder %s35, 1
      %p88 = por %p86, %p87
      %p89 = scmp.ne.s32.totalorder %s78, %s79
      %p90 = scmp.eq.s32.totalorder %s35, 0
      %p91 = por %p89, %p90
      %p92 = scmp.ne.s32.totalorder %s78, %s79
      %p93 = scmp.eq.s32.totalorder %s36, 1
      %p94 = por %p92, %p93
      %p96 = scmp.ne.s32.totalorder %s79, %s95
      %p97 = scmp.eq.s32.totalorder %s36, 0
      %p98 = por %p96, %p97
      %s99 = ssub.s32 %s37, %s49
      %s100 = ssub.s32 %s38, %s45
      %s101 = sor.u32 %s99, %s100
      %p102 = scmp.eq.s32.totalorder %s101, 0
      %s104 = sadd.s32 %s103, 1
      %s105 = scalar_select %p102, %s103, %s104
      %p108 = pneg %p102
      %p109 = scmp.eq.s32.totalorder %s30, 1
      %p110 = por %p108, %p109
      %p111 = scmp.ne.s32.totalorder %s103, %s106
      %p112 = scmp.eq.s32.totalorder %s30, 0
      %p113 = por %p111, %p112
      %p114 = scmp.ne.s32.totalorder %s103, %s106
      %p115 = scmp.eq.s32.totalorder %s35, 1
      %p116 = por %p114, %p115
      %p117 = scmp.ne.s32.totalorder %s106, %s107
      %p118 = scmp.eq.s32.totalorder %s35, 0
      %p119 = por %p117, %p118
      %p120 = scmp.ne.s32.totalorder %s106, %s107
      %p121 = scmp.eq.s32.totalorder %s36, 1
      %p122 = por %p120, %p121
      %p124 = scmp.ne.s32.totalorder %s107, %s123
      %p125 = scmp.eq.s32.totalorder %s36, 0
      %p126 = por %p124, %p125
      %s127 = ssub.s32 %s37, %s49
      %s128 = ssub.s32 %s38, %s45
      %s129 = sor.u32 %s127, %s128
      %p130 = scmp.eq.s32.totalorder %s129, 0
      %s132 = sadd.s32 %s131, 1
      %s133 = scalar_select %p130, %s131, %s132
      %p136 = pneg %p130
      %p137 = scmp.eq.s32.totalorder %s30, 1
      %p138 = por %p136, %p137
      %p139 = scmp.ne.s32.totalorder %s131, %s134
      %p140 = scmp.eq.s32.totalorder %s30, 0
      %p141 = por %p139, %p140
      %p142 = scmp.ne.s32.totalorder %s131, %s134
      %p143 = scmp.eq.s32.totalorder %s35, 1
      %p144 = por %p142, %p143
      %p145 = scmp.ne.s32.totalorder %s134, %s135
      %p146 = scmp.eq.s32.totalorder %s35, 0
      %p147 = por %p145, %p146
      %p148 = scmp.ne.s32.totalorder %s134, %s135
      %p149 = scmp.eq.s32.totalorder %s36, 1
      %p150 = por %p148, %p149
      %p152 = scmp.ne.s32.totalorder %s135, %s151
      %p153 = scmp.eq.s32.totalorder %s36, 0
      %p154 = por %p152, %p153
      %s155 = ssub.s32 %s37, %s49
      %s156 = ssub.s32 %s38, %s45
      %s157 = sor.u32 %s155, %s156
      %p158 = scmp.eq.s32.totalorder %s157, 0
      %s160 = sadd.s32 %s159, 1
      %s161 = scalar_select %p158, %s159, %s160
      %p164 = pneg %p158
      %p165 = scmp.eq.s32.totalorder %s30, 1
      %p166 = por %p164, %p165
      %p167 = scmp.ne.s32.totalorder %s159, %s162
      %p168 = scmp.eq.s32.totalorder %s30, 0
      %p169 = por %p167, %p168
      %p170 = scmp.ne.s32.totalorder %s159, %s162
      %p171 = scmp.eq.s32.totalorder %s35, 1
      %p172 = por %p170, %p171
      %p173 = scmp.ne.s32.totalorder %s162, %s163
      %p174 = scmp.eq.s32.totalorder %s35, 0
      %p175 = por %p173, %p174
      %p176 = scmp.ne.s32.totalorder %s162, %s163
      %p177 = scmp.eq.s32.totalorder %s36, 1
      %p178 = por %p176, %p177
      %p180 = scmp.ne.s32.totalorder %s163, %s179
      %p181 = scmp.eq.s32.totalorder %s36, 0
      %p182 = por %p180, %p181
      %s183 = ssub.s32 %s37, %s49
      %s184 = ssub.s32 %s38, %s45
      %s185 = sor.u32 %s183, %s184
      %p186 = scmp.eq.s32.totalorder %s185, 0
      %s188 = sadd.s32 %s187, 1
      %s189 = scalar_select %p186, %s187, %s188
      %p192 = pneg %p186
      %p193 = scmp.eq.s32.totalorder %s30, 1
      %p194 = por %p192, %p193
      %p195 = scmp.ne.s32.totalorder %s187, %s190
      %p196 = scmp.eq.s32.totalorder %s30, 0
      %p197 = por %p195, %p196
      %p198 = scmp.ne.s32.totalorder %s187, %s190
      %p199 = scmp.eq.s32.totalorder %s35, 1
      %p200 = por %p198, %p199
      %p201 = scmp.ne.s32.totalorder %s190, %s191
      %p202 = scmp.eq.s32.totalorder %s35, 0
      %p203 = por %p201, %p202
      %p204 = scmp.ne.s32.totalorder %s190, %s191
      %p205 = scmp.eq.s32.totalorder %s36, 1
      %p206 = por %p204, %p205
      %p208 = scmp.ne.s32.totalorder %s191, %s207
      %p209 = scmp.eq.s32.totalorder %s36, 0
      %p210 = por %p208, %p209
      %s211 = ssub.s32 %s37, %s49
      %s212 = ssub.s32 %s38, %s45
      %s213 = sor.u32 %s211, %s212
      %p214 = scmp.eq.s32.totalorder %s213, 0
      %s216 = sadd.s32 %s215, 1
      %s217 = scalar_select %p214, %s215, %s216
      %p220 = pneg %p214
      %p221 = scmp.eq.s32.totalorder %s30, 1
      %p222 = por %p220, %p221
      %p223 = scmp.ne.s32.totalorder %s215, %s218
      %p224 = scmp.eq.s32.totalorder %s30, 0
      %p225 = por %p223, %p224
      %p226 = scmp.ne.s32.totalorder %s215, %s218
      %p227 = scmp.eq.s32.totalorder %s35, 1
      %p228 = por %p226, %p227
      %p229 = scmp.ne.s32.totalorder %s218, %s219
      %p230 = scmp.eq.s32.totalorder %s35, 0
      %p231 = por %p229, %p230
      %p232 = scmp.ne.s32.totalorder %s218, %s219
      %p233 = scmp.eq.s32.totalorder %s36, 1
      %p234 = por %p232, %p233
      %p236 = scmp.ne.s32.totalorder %s219, %s235
      %p237 = scmp.eq.s32.totalorder %s36, 0
      %p238 = por %p236, %p237
      %s239 = ssub.s32 %s37, %s49
      %p240 = scmp.eq.s32.totalorder %s239, 0
      %s242 = sadd.s32 %s241, 1
      %s243 = scalar_select %p240, %s241, %s242
      %p246 = pneg %p240
      %p247 = scmp.eq.s32.totalorder %s30, 1
      %p248 = por %p246, %p247
      %p249 = scmp.ne.s32.totalorder %s241, %s244
      %p250 = scmp.eq.s32.totalorder %s30, 0
      %p251 = por %p249, %p250
      %p252 = scmp.ne.s32.totalorder %s241, %s244
      %p253 = scmp.eq.s32.totalorder %s35, 1
      %p254 = por %p252, %p253
      %p255 = scmp.ne.s32.totalorder %s244, %s245
      %p256 = scmp.eq.s32.totalorder %s35, 0
      %p257 = por %p255, %p256
      %p258 = scmp.ne.s32.totalorder %s244, %s245
      %p259 = scmp.eq.s32.totalorder %s36, 1
      %p260 = por %p258, %p259
      %p262 = scmp.ne.s32.totalorder %s245, %s261
      %p263 = scmp.eq.s32.totalorder %s36, 0
      %p264 = por %p262, %p263
      %p265 = scmp.le.s32.totalorder 1, %s30
      %p266 = scmp.lt.s32.totalorder %s30, 3
      %p267 = pnand %p265, %p266
      %p268 = pneg %p267
      // Predicated region
      $region9: #{tpu_custom_call.1} parent=5 // pred_check
        _
      $region10: #{tpu_custom_call.1} parent=5 // pred_check_branch
        %270 = sbr.rel (%p267) target = $region12
      $region11: #{tpu_custom_call.1} parent=5 // pred_region
        %s271 = ssub.s32 %s30, 1
        // Predicated region
        $region13: #{tpu_custom_call.1} parent=11 // pred_check
          %p272 = pneg %p63
        $region14: #{tpu_custom_call.1} parent=11 // pred_check_branch
          %274 = sbr.rel (%p272) target = $region16
        $region15: #{tpu_custom_call.1} parent=11 // pred_region
          _
        $region16: #{tpu_custom_call.1} parent=11 // pred_fallthru
          _
      $region12: #{tpu_custom_call.1} parent=5 // pred_fallthru
        _
      %p275 = scmp.lt.s32.totalorder %s30, 2
      // Predicated region
      $region17: #{tpu_custom_call.1} parent=5 // pred_check
        %p276 = pneg %p275
      $region18: #{tpu_custom_call.1} parent=5 // pred_check_branch
        %278 = sbr.rel (%p276) target = $region20
      $region19: #{tpu_custom_call.1} parent=5 // pred_region
        // Predicated region
        $region21: #{tpu_custom_call.1} parent=19 // pred_check
          %p279 = pneg %p85
        $region22: #{tpu_custom_call.1} parent=19 // pred_check_branch
          %281 = sbr.rel (%p279) target = $region24
        $region23: #{tpu_custom_call.1} parent=19 // pred_region
          %s282 = sand.u32 %s75, 1
          %s283 = scalar_lea.sflag [#allocation4], %s282
          %s284 = sand.u32 %s75, 1
          %s285 = smul.addr %s284, 8
          %s286 = scalar_lea.vmem [#allocation3], %s285
          %s288 = ssub.s32 128, 128
          %289 = vsyncadd %s283, %s288
          %s290 = sadd.s32 %s38, %s37
          %s291 = smul.addr %s290, 128
          %s292 = scalar_lea.hbm %s1, %s291
          %s294 = sshll.u32 %s286, 4
          %s295 = int_to_ptr.vmem [resolvable:$true] %s294
          %297 = dma.hbm_to_vmem [thread:$0]  %s292, 128, %s295, %s283
        $region24: #{tpu_custom_call.1} parent=19 // pred_fallthru
          _
        // Predicated region
        $region25: #{tpu_custom_call.1} parent=19 // pred_check
          %p298 = pneg %p113
        $region26: #{tpu_custom_call.1} parent=19 // pred_check_branch
          %300 = sbr.rel (%p298) target = $region28
        $region27: #{tpu_custom_call.1} parent=19 // pred_region
          %s301 = sand.u32 %s30, 1
          %s302 = scalar_lea.sflag [#allocation7], %s301
          %s303 = sand.u32 %s103, 1
          %s304 = smul.addr %s303, 8
          %s305 = scalar_lea.vmem [#allocation6], %s304
          %s307 = ssub.s32 128, 128
          %308 = vsyncadd %s302, %s307
          %s309 = sadd.s32 %s38, %s37
          %s310 = smul.addr %s309, 128
          %s311 = scalar_lea.hbm %s2, %s310
          %s313 = sshll.u32 %s305, 4
          %s314 = int_to_ptr.vmem [resolvable:$true] %s313
          %316 = dma.hbm_to_vmem [thread:$0]  %s311, 128, %s314, %s302
        $region28: #{tpu_custom_call.1} parent=19 // pred_fallthru
          _
        // Predicated region
        $region29: #{tpu_custom_call.1} parent=19 // pred_check
          %p317 = pneg %p141
        $region30: #{tpu_custom_call.1} parent=19 // pred_check_branch
          %319 = sbr.rel (%p317) target = $region32
        $region31: #{tpu_custom_call.1} parent=19 // pred_region
          %s320 = sand.u32 %s30, 1
          %s321 = scalar_lea.sflag [#allocation7], %s320
          %s322 = sand.u32 %s131, 1
          %s323 = smul.addr %s322, 8
          %s324 = scalar_lea.vmem [#allocation8], %s323
          %s326 = ssub.s32 128, 128
          %327 = vsyncadd %s321, %s326
          %s328 = sadd.s32 %s38, %s37
          %s329 = smul.addr %s328, 128
          %s330 = scalar_lea.hbm %s3, %s329
          %s332 = sshll.u32 %s324, 4
          %s333 = int_to_ptr.vmem [resolvable:$true] %s332
          %335 = dma.hbm_to_vmem [thread:$0]  %s330, 128, %s333, %s321
        $region32: #{tpu_custom_call.1} parent=19 // pred_fallthru
          _
        // Predicated region
        $region33: #{tpu_custom_call.1} parent=19 // pred_check
          %p336 = pneg %p169
        $region34: #{tpu_custom_call.1} parent=19 // pred_check_branch
          %338 = sbr.rel (%p336) target = $region36
        $region35: #{tpu_custom_call.1} parent=19 // pred_region
          %s339 = sand.u32 %s159, 1
          %s340 = scalar_lea.sflag [#allocation10], %s339
          %s341 = sand.u32 %s159, 1
          %s342 = smul.addr %s341, 8
          %s343 = scalar_lea.vmem [#allocation9], %s342
          %s345 = ssub.s32 128, 128
          %346 = vsyncadd %s340, %s345
          %s347 = sadd.s32 %s38, %s37
          %s348 = smul.addr %s347, 128
          %s349 = scalar_lea.hbm %s4, %s348
          %s351 = sshll.u32 %s343, 4
          %s352 = int_to_ptr.vmem [resolvable:$true] %s351
          %354 = dma.hbm_to_vmem [thread:$0]  %s349, 128, %s352, %s340
        $region36: #{tpu_custom_call.1} parent=19 // pred_fallthru
          _
      $region20: #{tpu_custom_call.1} parent=5 // pred_fallthru
        _
      %p355 = scmp.le.s32.totalorder 1, %s30
      %p356 = scmp.lt.s32.totalorder %s30, 3
      %p357 = pnand %p355, %p356
      %p358 = pneg %p357
      // Predicated region
      $region37: #{tpu_custom_call.1} parent=5 // pred_check
        _
      $region38: #{tpu_custom_call.1} parent=5 // pred_check_branch
        %360 = sbr.rel (%p357) target = $region40
      $region39: #{tpu_custom_call.1} parent=5 // pred_region
        %s361 = ssub.s32 %s30, 1
        %s362 = sand.u32 %s78, 1
        %s363 = scalar_lea.sflag [#allocation4], %s362
        %s364 = sand.u32 %s78, 1
        %s365 = smul.addr %s364, 8
        %s366 = scalar_lea.vmem [#allocation3], %s365
        // Predicated region
        $region41: #{tpu_custom_call.1} parent=39 // pred_check
          %p367 = pneg %p91
        $region42: #{tpu_custom_call.1} parent=39 // pred_check_branch
          %369 = sbr.rel (%p367) target = $region44
        $region43: #{tpu_custom_call.1} parent=39 // pred_region
          %370 = dma.done %s363, 128
        $region44: #{tpu_custom_call.1} parent=39 // pred_fallthru
          _
        %s371 = sand.u32 %s35, 1
        %s372 = scalar_lea.sflag [#allocation7], %s371
        %s373 = sand.u32 %s106, 1
        %s374 = smul.addr %s373, 8
        %s375 = scalar_lea.vmem [#allocation6], %s374
        // Predicated region
        $region45: #{tpu_custom_call.1} parent=39 // pred_check
          %p376 = pneg %p119
        $region46: #{tpu_custom_call.1} parent=39 // pred_check_branch
          %378 = sbr.rel (%p376) target = $region48
        $region47: #{tpu_custom_call.1} parent=39 // pred_region
          %379 = dma.done %s372, 128
        $region48: #{tpu_custom_call.1} parent=39 // pred_fallthru
          _
        %s380 = sand.u32 %s35, 1
        %s381 = scalar_lea.sflag [#allocation7], %s380
        %s382 = sand.u32 %s134, 1
        %s383 = smul.addr %s382, 8
        %s384 = scalar_lea.vmem [#allocation8], %s383
        // Predicated region
        $region49: #{tpu_custom_call.1} parent=39 // pred_check
          %p385 = pneg %p147
        $region50: #{tpu_custom_call.1} parent=39 // pred_check_branch
          %387 = sbr.rel (%p385) target = $region52
        $region51: #{tpu_custom_call.1} parent=39 // pred_region
          %388 = dma.done %s381, 128
        $region52: #{tpu_custom_call.1} parent=39 // pred_fallthru
          _
        %s389 = sand.u32 %s162, 1
        %s390 = scalar_lea.sflag [#allocation10], %s389
        %s391 = sand.u32 %s162, 1
        %s392 = smul.addr %s391, 8
        %s393 = scalar_lea.vmem [#allocation9], %s392
        // Predicated region
        $region53: #{tpu_custom_call.1} parent=39 // pred_check
          %p394 = pneg %p175
        $region54: #{tpu_custom_call.1} parent=39 // pred_check_branch
          %396 = sbr.rel (%p394) target = $region56
        $region55: #{tpu_custom_call.1} parent=39 // pred_region
          %397 = dma.done %s390, 128
        $region56: #{tpu_custom_call.1} parent=39 // pred_fallthru
          _
        %p398 = pneg %p63
        %p399 = pneg %p60
        %s400 = sand.u32 %s78, 1
        %s401 = scalar_lea.sflag [#allocation4], %s400
        %s402 = sand.u32 %s78, 1
        %s403 = smul.addr %s402, 8
        %s404 = scalar_lea.vmem [#allocation3], %s403
        %p405 = pneg %p91
        %p406 = pneg %p88
        %s407 = sand.u32 %s35, 1
        %s408 = scalar_lea.sflag [#allocation7], %s407
        %s409 = sand.u32 %s106, 1
        %s410 = smul.addr %s409, 8
        %s411 = scalar_lea.vmem [#allocation6], %s410
        %p412 = pneg %p119
        %p413 = pneg %p116
        %s414 = sand.u32 %s35, 1
        %s415 = scalar_lea.sflag [#allocation7], %s414
        %s416 = sand.u32 %s134, 1
        %s417 = smul.addr %s416, 8
        %s418 = scalar_lea.vmem [#allocation8], %s417
        %p419 = pneg %p147
        %p420 = pneg %p144
        %s421 = sand.u32 %s162, 1
        %s422 = scalar_lea.sflag [#allocation10], %s421
        %s423 = sand.u32 %s162, 1
        %s424 = smul.addr %s423, 8
        %s425 = scalar_lea.vmem [#allocation9], %s424
        %p426 = pneg %p175
        %p427 = pneg %p172
        %p428 = pneg %p203
        %p429 = pneg %p200
        %s430 = sand.u32 %s190, 1
        %s431 = scalar_lea.sflag [#allocation5], %s430
        %s432 = sand.u32 %s190, 1
        %s433 = smul.addr %s432, 8
        %s434 = scalar_lea.vmem [#allocation11], %s433
        %p435 = pneg %p231
        %p436 = pneg %p228
        %s437 = sand.u32 %s35, 1
        %s438 = scalar_lea.sflag [#allocation13], %s437
        %s439 = sand.u32 %s218, 1
        %s440 = smul.addr %s439, 8
        %s441 = scalar_lea.vmem [#allocation12], %s440
        %p442 = pneg %p257
        %p443 = pneg %p254
        %s444 = sand.u32 %s35, 1
        %s445 = scalar_lea.sflag [#allocation13], %s444
        %s446 = sand.u32 %s244, 1
        %s447 = scalar_lea.vmem [#allocation14], %s446
        %v448 = vld [vmem:[%s366] sm:$0xff]
        %v449 = vld [vmem:[%s375] sm:$0xff]
        %v450 = vld [vmem:[%s384] sm:$0xff]
        %v451 = vsub.f32 %v448, %v449
        %v452 = vadd.f32 %v451, %v450
        %v453 = vand.u32 2147483647, %v452
        %v454 = vrot.slane %v453, 4
        %v455 = vadd.f32 %v453, %v454
        %v456 = vrot.slane %v455, 2
        %v457 = vadd.f32 %v455, %v456
        %v458 = vrot.slane %v457, 1
        %v459 = vadd.f32 %v457, %v458
        %p460 = scmp.eq.s32.totalorder %s40, 0
        // Predicated region
        $region57: #{tpu_custom_call.1} parent=39 // pred_check
          %p461 = pneg %p460
        $region58: #{tpu_custom_call.1} parent=39 // pred_check_branch
          %463 = sbr.rel (%p461) target = $region60
        $region59: #{tpu_custom_call.1} parent=39 // pred_region
          %464 = vst [vmem:[%s447] sm:$0x1] %v459
        $region60: #{tpu_custom_call.1} parent=39 // pred_fallthru
          _
        %p465 = scmp.gt.s32.totalorder %s40, 0
        // Predicated region
        $region61: #{tpu_custom_call.1} parent=39 // pred_check
          %p466 = pneg %p465
        $region62: #{tpu_custom_call.1} parent=39 // pred_check_branch
          %468 = sbr.rel (%p466) target = $region64
        $region63: #{tpu_custom_call.1} parent=39 // pred_region
          %v469 = vld [vmem:[%s447] sm:$0x1]
          %v470 = vadd.f32 %v469, %v459
          %471 = vst [vmem:[%s447] sm:$0x1] %v470
        $region64: #{tpu_custom_call.1} parent=39 // pred_fallthru
          _
        %s472 = sld [smem:[#allocation2]]
        %s473 = ssub.f32 1.0, %s472
        %v474 = vstv %s473
        %v475 = vmul.f32 %v474, %v448
        %v476 = vstv %s472
        %v477 = vmul.f32 %v476, %v449
        %v478 = vadd.f32 %v475, %v477
        %v479 = vmul.f32 %v476, %v450
        %v480 = vsub.f32 %v478, %v479
        %481 = vst [vmem:[%s441] sm:$0xff] %v480
        %v482 = vld [vmem:[%s393] sm:$0xff]
        %v483 = vmul.f32 %v476, %v482
        %v484 = vsub.f32 %v478, %v483
        %485 = vst [vmem:[%s434] sm:$0xff] %v484
        %s486 = sand.u32 %s190, 1
        %s487 = scalar_lea.sflag [#allocation5], %s486
        %s488 = sand.u32 %s190, 1
        %s489 = smul.addr %s488, 8
        %s490 = scalar_lea.vmem [#allocation11], %s489
        %s491 = sand.u32 %s35, 1
        %s492 = scalar_lea.sflag [#allocation13], %s491
        %s493 = sand.u32 %s218, 1
        %s494 = smul.addr %s493, 8
        %s495 = scalar_lea.vmem [#allocation12], %s494
        %s496 = sand.u32 %s35, 1
        %s497 = scalar_lea.sflag [#allocation13], %s496
        %s498 = sand.u32 %s244, 1
        %s499 = scalar_lea.vmem [#allocation14], %s498
        // Predicated region
        $region65: #{tpu_custom_call.1} parent=39 // pred_check
          %p500 = pneg %p200
        $region66: #{tpu_custom_call.1} parent=39 // pred_check_branch
          %502 = sbr.rel (%p500) target = $region68
        $region67: #{tpu_custom_call.1} parent=39 // pred_region
          %s504 = ssub.s32 128, 128
          %505 = vsyncadd %s487, %s504
          %s506 = sadd.s32 %s40, %s39
          %s507 = smul.addr %s506, 128
          %s508 = scalar_lea.hbm %s5, %s507
          %s510 = sshll.u32 %s490, 4
          %s511 = int_to_ptr.vmem [resolvable:$true] %s510
          %513 = dma.vmem_to_hbm [thread:$0]  %s511, 128, %s508, %s487
        $region68: #{tpu_custom_call.1} parent=39 // pred_fallthru
          _
        // Predicated region
        $region69: #{tpu_custom_call.1} parent=39 // pred_check
          %p514 = pneg %p228
        $region70: #{tpu_custom_call.1} parent=39 // pred_check_branch
          %516 = sbr.rel (%p514) target = $region72
        $region71: #{tpu_custom_call.1} parent=39 // pred_region
          %s518 = ssub.s32 128, 128
          %519 = vsyncadd %s492, %s518
          %s520 = sadd.s32 %s40, %s39
          %s521 = smul.addr %s520, 128
          %s522 = scalar_lea.hbm %s6, %s521
          %s524 = sshll.u32 %s495, 4
          %s525 = int_to_ptr.vmem [resolvable:$true] %s524
          %527 = dma.vmem_to_hbm [thread:$0]  %s525, 128, %s522, %s492
        $region72: #{tpu_custom_call.1} parent=39 // pred_fallthru
          _
        // Predicated region
        $region73: #{tpu_custom_call.1} parent=39 // pred_check
          %p528 = pneg %p254
        $region74: #{tpu_custom_call.1} parent=39 // pred_check_branch
          %530 = sbr.rel (%p528) target = $region76
        $region75: #{tpu_custom_call.1} parent=39 // pred_region
          %s532 = ssub.s32 16, 16
          %533 = vsyncadd %s497, %s532
          %s534 = smul.addr %s39, 16
          %s535 = scalar_lea.hbm %s7, %s534
          %s537 = sshll.u32 %s499, 4
          %s538 = int_to_ptr.vmem [resolvable:$true] %s537
          %540 = dma.vmem_to_hbm [thread:$0]  %s538, 16, %s535, %s497
        $region76: #{tpu_custom_call.1} parent=39 // pred_fallthru
          _
      $region40: #{tpu_custom_call.1} parent=5 // pred_fallthru
        _
      %p541 = scmp.le.s32.totalorder 2, %s30
      // Predicated region
      $region77: #{tpu_custom_call.1} parent=5 // pred_check
        %p542 = pneg %p541
      $region78: #{tpu_custom_call.1} parent=5 // pred_check_branch
        %544 = sbr.rel (%p542) target = $region80
      $region79: #{tpu_custom_call.1} parent=5 // pred_region
        %s545 = ssub.s32 %s30, 2
        // Predicated region
        $region81: #{tpu_custom_call.1} parent=79 // pred_check
          %p546 = pneg %p206
        $region82: #{tpu_custom_call.1} parent=79 // pred_check_branch
          %548 = sbr.rel (%p546) target = $region84
        $region83: #{tpu_custom_call.1} parent=79 // pred_region
          %s549 = sand.u32 %s191, 1
          %s550 = scalar_lea.sflag [#allocation5], %s549
          %s551 = sand.u32 %s191, 1
          %s552 = smul.addr %s551, 8
          %s553 = scalar_lea.vmem [#allocation11], %s552
          %554 = dma.done %s550, 128
        $region84: #{tpu_custom_call.1} parent=79 // pred_fallthru
          _
        // Predicated region
        $region85: #{tpu_custom_call.1} parent=79 // pred_check
          %p555 = pneg %p234
        $region86: #{tpu_custom_call.1} parent=79 // pred_check_branch
          %557 = sbr.rel (%p555) target = $region88
        $region87: #{tpu_custom_call.1} parent=79 // pred_region
          %s558 = sand.u32 %s36, 1
          %s559 = scalar_lea.sflag [#allocation13], %s558
          %s560 = sand.u32 %s219, 1
          %s561 = smul.addr %s560, 8
          %s562 = scalar_lea.vmem [#allocation12], %s561
          %563 = dma.done %s559, 128
        $region88: #{tpu_custom_call.1} parent=79 // pred_fallthru
          _
        // Predicated region
        $region89: #{tpu_custom_call.1} parent=79 // pred_check
          %p564 = pneg %p260
        $region90: #{tpu_custom_call.1} parent=79 // pred_check_branch
          %566 = sbr.rel (%p564) target = $region92
        $region91: #{tpu_custom_call.1} parent=79 // pred_region
          %s567 = sand.u32 %s36, 1
          %s568 = scalar_lea.sflag [#allocation13], %s567
          %s569 = sand.u32 %s245, 1
          %s570 = scalar_lea.vmem [#allocation14], %s569
          %571 = dma.done %s568, 16
        $region92: #{tpu_custom_call.1} parent=79 // pred_fallthru
          _
      $region80: #{tpu_custom_call.1} parent=5 // pred_fallthru
        _
    $region6: #{tpu_custom_call.1} parent=1 // loop_footer
      %s34 = sadd.s32 1, %s30
    $region7: #{tpu_custom_call.1} parent=1 // loop_footer_branch
      %29 = sbr.rel target = $region3
    $region8: #{tpu_custom_call.1} parent=1 // loop_exit
      _
    %572 = vsyncpa [#allocation4], 1
    %s573 = scalar_lea.sflag [#allocation4], 1
    %574 = vsyncpa %s573, 1
    %575 = vsyncpa [#allocation7], 1
    %s576 = scalar_lea.sflag [#allocation7], 1
    %577 = vsyncpa %s576, 1
    %578 = vsyncpa [#allocation10], 1
    %s579 = scalar_lea.sflag [#allocation10], 1
    %580 = vsyncpa %s579, 1
    %581 = vsyncpa [#allocation5], 1
    %s582 = scalar_lea.sflag [#allocation5], 1
    %583 = vsyncpa %s582, 1
    %584 = vsyncpa [#allocation13], 1
    %s585 = scalar_lea.sflag [#allocation13], 1
    %586 = vsyncpa %s585, 1

</llo_original>
